<compile_context>
chip_gen: v7x
topology: tpu7x:2x2x1
jax: 0.10.0
libtpu: 0.0.40
codegen_flags: <defaults>
</compile_context>

<pallas_src>
import jax
import jax.numpy as jnp
from jax.experimental import pallas as pl
from jax.experimental.pallas import tpu as pltpu


def bilstm_kernel(embcat_ref, wih_ref, whh_ref, w12_ref, b12_ref, out_ref):
    H = whh_ref.shape[0]              # 2 * per-direction hidden ([fwd | bwd])
    B = out_ref.shape[0]
    T = embcat_ref.shape[0] // B

    # ---- Single hoisted input projection over the whole sequence.
    # embcat row block t = [emb(t) | emb(T-1-t)]; fwd and bwd gate columns of
    # wih are disjoint, so the result's row block t is already
    # gx_fwd(t) + gx_bwd(T-1-t).
    gx = jnp.dot(embcat_ref[...], wih_ref[...],
                 preferred_element_type=jnp.float32)                  # (T*B, 4H) f32

    whh = whh_ref[...]                                                # (H, 4H) bf16, block-diag
    h = jnp.zeros((B, H), jnp.float32)                                # [h_fwd | h_bwd]
    c = jnp.zeros((B, H), jnp.float32)
    m = jnp.full((B, H), -1.0, jnp.float32)                           # h in (-1,1) -> safe init

    # ---- Fused bidirectional recurrence, fully unrolled (T small & static).
    # One block-structured (B,H)@(H,4H) matmul drives BOTH directions.
    # TODO(synk): if T grows past ~16-32, switch to lax.fori_loop(unroll=2-4)
    # with pl.ds row slices into gx to cap vreg live ranges.
    for t in range(T):
        gates = gx[t * B:(t + 1) * B, :] + jnp.dot(
            h.astype(jnp.bfloat16), whh,
            preferred_element_type=jnp.float32)                       # (B, 4H)
        # ONE full-lane sigmoid; the x2 g-gate weight fold makes
        # 2*sigmoid(2x) - 1 == tanh(x), so no separate gate tanh is needed.
        s = jax.nn.sigmoid(gates)
        i_g = s[:, 0 * H:1 * H]
        f_g = s[:, 1 * H:2 * H]
        g_g = 2.0 * s[:, 2 * H:3 * H] - 1.0
        o_g = s[:, 3 * H:4 * H]
        c = f_g * c + i_g * g_g                                       # f32 elementwise
        h = o_g * jnp.tanh(c)
        m = jnp.maximum(m, h)                                         # pooling tanh hoisted

    pooled = jnp.tanh(m)                                              # tanh∘max == max∘tanh

    # ---- Fused head: m is already [max_fwd | max_bwd] (torch concat order);
    # the two Linears have no nonlinearity between them, so one dot + bias.
    out_ref[...] = (jnp.dot(pooled.astype(jnp.bfloat16), w12_ref[...],
                            preferred_element_type=jnp.float32)
                    + b12_ref[...])                                   # (B, C)


def pack_params(params):
    """Host-side weight re-layout: zero transposes/concats in-kernel, one packed
    input-projection matmul, one recurrence matmul per step, one fused head."""
    wih_f, whh_f = params["wih_f"], params["whh_f"]      # (4*H2, D), (4*H2, H2)
    wih_b, whh_b = params["wih_b"], params["whh_b"]
    H2 = whh_f.shape[1]
    H = 2 * H2
    D = wih_f.shape[1]

    # Packed input weight (2D, 4H): rows 0:D = wih_f.T -> fwd gate columns,
    # rows D:2D = wih_b.T -> bwd gate columns.  Gate order i, f, g, o; each
    # gate block's columns are [fwd | bwd].  g-gate columns scaled by 2
    # (exact) for the single-sigmoid trick.
    wih = jnp.zeros((2 * D, 4 * H), jnp.float32)
    whh = jnp.zeros((H, 4 * H), jnp.float32)              # block-diagonal recurrence weight
    for k in range(4):
        scale = 2.0 if k == 2 else 1.0
        wih = wih.at[0:D, k * H:k * H + H2].set(scale * wih_f[k * H2:(k + 1) * H2, :].T)
        wih = wih.at[D:2 * D, k * H + H2:(k + 1) * H].set(scale * wih_b[k * H2:(k + 1) * H2, :].T)
        whh = whh.at[0:H2, k * H:k * H + H2].set(scale * whh_f[k * H2:(k + 1) * H2, :].T)
        whh = whh.at[H2:H, k * H + H2:(k + 1) * H].set(scale * whh_b[k * H2:(k + 1) * H2, :].T)

    # Fused head:  y = (m @ w1.T + b1) @ w2.T + b2  =  m @ (w1.T @ w2.T) + (b1 @ w2.T + b2)
    w12 = params["w1"].T @ params["w2"].T                 # (H, C)
    b12 = params["b1"] @ params["w2"].T + params["b2"]    # (1, C)

    return {
        "wih": wih.astype(jnp.bfloat16),
        "whh": whh.astype(jnp.bfloat16),
        "w12": w12.astype(jnp.bfloat16),
        "b12": b12.astype(jnp.float32),
    }


def bilstm_forward(x_ids, params):
    """x_ids: (T, B) int32 token ids (time-major, PyTorch seq-first layout)."""
    # Embedding lookup (gather) stays as plain-JAX glue.
    # TODO(synk): at scale, move the gather in-kernel (PrefetchScalarGridSpec,
    # num_scalar_prefetch=1 + per-row DMA), stream emb in time blocks sized for
    # v7x's 64 MiB VMEM (set vmem_limit_bytes), and add a "parallel" batch grid
    # axis so both v7x TensorCores get work; at this toy size a grid only adds
    # overhead and everything fits in VMEM.
    emb = jnp.take(params["embed"], x_ids, axis=0)                    # (T, B, D) f32
    T, B, D = emb.shape
    C = params["w2"].shape[0]

    packed = pack_params(params)
    # [emb(t) | emb(T-1-t)] along features: one MXU pass yields the already-
    # summed fwd+bwd input-gate contributions for each fused step.
    emb_cat = jnp.concatenate([emb, emb[::-1]], axis=-1)              # (T, B, 2D)
    emb_cat = emb_cat.reshape(T * B, 2 * D).astype(jnp.bfloat16)

    vmem = pl.BlockSpec(memory_space=pltpu.MemorySpace.VMEM)
    operands = (emb_cat, packed["wih"], packed["whh"], packed["w12"], packed["b12"])

    # (B, C) = (8, 5) output is a single masked store — lane-pad only if the
    # head ever scales.
    return pl.pallas_call(
        bilstm_kernel,
        out_shape=jax.ShapeDtypeStruct((B, C), jnp.float32),
        in_specs=[vmem] * len(operands),
        out_specs=vmem,
    )(*operands)


def make_params(key, V, D, H, C):
    """H = lstm_hidden_dim (both directions); per-direction size is H // 2."""
    H2 = H // 2
    ks = jax.random.split(key, 9)
    u = lambda k, shape, s: jax.random.uniform(k, shape, jnp.float32, -s, s)
    sl = H2 ** -0.5
    return {
        "embed": u(ks[0], (V, D), 1.0),
        "wih_f": u(ks[1], (4 * H2, D), sl),
        "whh_f": u(ks[2], (4 * H2, H2), sl),
        "wih_b": u(ks[3], (4 * H2, D), sl),
        "whh_b": u(ks[4], (4 * H2, H2), sl),
        "w1":    u(ks[5], (H2, H), H ** -0.5),
        "b1":    u(ks[6], (1, H2), H ** -0.5),
        "w2":    u(ks[7], (C, H2), H2 ** -0.5),
        "b2":    u(ks[8], (1, C), H2 ** -0.5),
    }


def reference_forward(x_ids, params):
    """Pure-JAX f32 reference mirroring the PyTorch forward semantics."""
    emb = jnp.take(params["embed"], x_ids, axis=0).astype(jnp.float32)  # (T, B, D)
    T, B, D = emb.shape
    H2 = params["whh_f"].shape[1]

    def step(wih, whh, h, c, x_t):
        gates = x_t @ wih.T + h @ whh.T
        i = jax.nn.sigmoid(gates[:, 0:H2])
        f = jax.nn.sigmoid(gates[:, H2:2 * H2])
        g = jnp.tanh(gates[:, 2 * H2:3 * H2])
        o = jax.nn.sigmoid(gates[:, 3 * H2:4 * H2])
        c = f * c + i * g
        h = o * jnp.tanh(c)
        return h, c

    h = jnp.zeros((B, H2)); c = jnp.zeros((B, H2)); outs_f = []
    for t in range(T):
        h, c = step(params["wih_f"], params["whh_f"], h, c, emb[t])
        outs_f.append(h)
    h = jnp.zeros((B, H2)); c = jnp.zeros((B, H2)); outs_b = [None] * T
    for t in range(T - 1, -1, -1):
        h, c = step(params["wih_b"], params["whh_b"], h, c, emb[t])
        outs_b[t] = h
    out = jnp.stack([jnp.concatenate([outs_f[t], outs_b[t]], axis=1)
                     for t in range(T)], axis=0)            # (T, B, H)
    out = jnp.tanh(out)
    pooled = jnp.max(out, axis=0)                           # (B, H)
    y = pooled @ params["w1"].T + params["b1"]
    y = y @ params["w2"].T + params["b2"]
    return y


if __name__ == "__main__":
    # Small, module-consistent sizes (dropout in the torch module is inactive:
    # num_layers=1, and this is the forward/inference path).
    V, D, H, C = 50, 16, 32, 5      # vocab, embed_dim, lstm_hidden_dim, class_num
    T, B = 8, 8                     # seq_len, batch (8 fills a sublane group)

    key = jax.random.PRNGKey(0)
    k_par, k_ids = jax.random.split(key)
    params = make_params(k_par, V, D, H, C)
    x_ids = jax.random.randint(k_ids, (T, B), 0, V, dtype=jnp.int32)

    logits = jax.block_until_ready(bilstm_forward(x_ids, params))
    ref = reference_forward(x_ids, params)

    assert logits.shape == (B, C)
    # Kernel uses bf16 matmul operands (f32 accumulate); tolerance accounts for that.
    assert jnp.allclose(logits, ref, atol=2e-2, rtol=2e-2), "mismatch vs reference"

    print("KERNEL_OK")
</pallas_src>

<mosaic_0001>
module attributes {stable_mosaic.version = 11 : i64} {
  func.func @bilstm_kernel(%arg0: memref<64x32xbf16, #tpu.memory_space<vmem>>, %arg1: memref<32x128xbf16, #tpu.memory_space<vmem>>, %arg2: memref<32x128xbf16, #tpu.memory_space<vmem>>, %arg3: memref<32x5xbf16, #tpu.memory_space<vmem>>, %arg4: memref<1x5xf32, #tpu.memory_space<vmem>>, %arg5: memref<8x5xf32, #tpu.memory_space<vmem>>) attributes {dimension_semantics = [], scalar_prefetch = 0 : i64, scratch_operands = 0 : i64, tpu.core_type = #tpu.core_type<tc>} {
    %c0 = arith.constant 0 : index
    %c0_0 = arith.constant 0 : index
    %0 = vector.load %arg0[%c0, %c0_0] : memref<64x32xbf16, #tpu.memory_space<vmem>>, vector<64x32xbf16>
    %c0_1 = arith.constant 0 : index
    %c0_2 = arith.constant 0 : index
    %1 = vector.load %arg1[%c0_1, %c0_2] : memref<32x128xbf16, #tpu.memory_space<vmem>>, vector<32x128xbf16>
    %cst = arith.constant dense<0.000000e+00> : vector<64x128xf32>
    %2 = tpu.matmul %0, %1, %cst {dimension_numbers = #tpu.dot_dimension_numbers<[1], [0], [0], [1], [0, 0, 1, 1], [], []>} : vector<64x32xbf16>, vector<32x128xbf16>, vector<64x128xf32> -> vector<64x128xf32>
    %c0_3 = arith.constant 0 : index
    %c0_4 = arith.constant 0 : index
    %3 = vector.load %arg2[%c0_3, %c0_4] : memref<32x128xbf16, #tpu.memory_space<vmem>>, vector<32x128xbf16>
    %cst_5 = arith.constant 0.000000e+00 : f32
    %4 = vector.broadcast %cst_5 : f32 to vector<8x32xf32>
    %cst_6 = arith.constant 0.000000e+00 : f32
    %5 = vector.broadcast %cst_6 : f32 to vector<8x32xf32>
    %cst_7 = arith.constant -1.000000e+00 : f32
    %6 = vector.broadcast %cst_7 : f32 to vector<8x32xf32>
    %7 = vector.extract_strided_slice %2 {offsets = [0, 0], sizes = [8, 128], strides = [1, 1]} : vector<64x128xf32> to vector<8x128xf32>
    %8 = arith.truncf %4 : vector<8x32xf32> to vector<8x32xbf16>
    %cst_8 = arith.constant dense<0.000000e+00> : vector<8x128xf32>
    %9 = tpu.matmul %8, %3, %cst_8 {dimension_numbers = #tpu.dot_dimension_numbers<[1], [0], [0], [1], [0, 0, 1, 1], [], []>} : vector<8x32xbf16>, vector<32x128xbf16>, vector<8x128xf32> -> vector<8x128xf32>
    %10 = arith.addf %7, %9 : vector<8x128xf32>
    %11 = arith.negf %10 : vector<8x128xf32>
    %12 = math.exp %11 : vector<8x128xf32>
    %cst_9 = arith.constant 1.000000e+00 : f32
    %13 = vector.broadcast %cst_9 : f32 to vector<8x128xf32>
    %14 = arith.addf %13, %12 : vector<8x128xf32>
    %15 = arith.divf %13, %14 : vector<8x128xf32>
    %16 = vector.extract_strided_slice %15 {offsets = [0, 0], sizes = [8, 32], strides = [1, 1]} : vector<8x128xf32> to vector<8x32xf32>
    %17 = vector.extract_strided_slice %15 {offsets = [0, 32], sizes = [8, 32], strides = [1, 1]} : vector<8x128xf32> to vector<8x32xf32>
    %18 = vector.extract_strided_slice %15 {offsets = [0, 64], sizes = [8, 32], strides = [1, 1]} : vector<8x128xf32> to vector<8x32xf32>
    %cst_10 = arith.constant 2.000000e+00 : f32
    %19 = vector.broadcast %cst_10 : f32 to vector<8x32xf32>
    %20 = arith.mulf %19, %18 : vector<8x32xf32>
    %cst_11 = arith.constant 1.000000e+00 : f32
    %21 = vector.broadcast %cst_11 : f32 to vector<8x32xf32>
    %22 = arith.subf %20, %21 : vector<8x32xf32>
    %23 = vector.extract_strided_slice %15 {offsets = [0, 96], sizes = [8, 32], strides = [1, 1]} : vector<8x128xf32> to vector<8x32xf32>
    %24 = arith.mulf %17, %5 : vector<8x32xf32>
    %25 = arith.mulf %16, %22 : vector<8x32xf32>
    %26 = arith.addf %24, %25 : vector<8x32xf32>
    %27 = math.tanh %26 : vector<8x32xf32>
    %28 = arith.mulf %23, %27 : vector<8x32xf32>
    %29 = arith.maximumf %6, %28 : vector<8x32xf32>
    %30 = vector.extract_strided_slice %2 {offsets = [8, 0], sizes = [8, 128], strides = [1, 1]} : vector<64x128xf32> to vector<8x128xf32>
    %31 = arith.truncf %28 : vector<8x32xf32> to vector<8x32xbf16>
    %cst_12 = arith.constant dense<0.000000e+00> : vector<8x128xf32>
    %32 = tpu.matmul %31, %3, %cst_12 {dimension_numbers = #tpu.dot_dimension_numbers<[1], [0], [0], [1], [0, 0, 1, 1], [], []>} : vector<8x32xbf16>, vector<32x128xbf16>, vector<8x128xf32> -> vector<8x128xf32>
    %33 = arith.addf %30, %32 : vector<8x128xf32>
    %34 = arith.negf %33 : vector<8x128xf32>
    %35 = math.exp %34 : vector<8x128xf32>
    %cst_13 = arith.constant 1.000000e+00 : f32
    %36 = vector.broadcast %cst_13 : f32 to vector<8x128xf32>
    %37 = arith.addf %36, %35 : vector<8x128xf32>
    %38 = arith.divf %36, %37 : vector<8x128xf32>
    %39 = vector.extract_strided_slice %38 {offsets = [0, 0], sizes = [8, 32], strides = [1, 1]} : vector<8x128xf32> to vector<8x32xf32>
    %40 = vector.extract_strided_slice %38 {offsets = [0, 32], sizes = [8, 32], strides = [1, 1]} : vector<8x128xf32> to vector<8x32xf32>
    %41 = vector.extract_strided_slice %38 {offsets = [0, 64], sizes = [8, 32], strides = [1, 1]} : vector<8x128xf32> to vector<8x32xf32>
    %cst_14 = arith.constant 2.000000e+00 : f32
    %42 = vector.broadcast %cst_14 : f32 to vector<8x32xf32>
    %43 = arith.mulf %42, %41 : vector<8x32xf32>
    %cst_15 = arith.constant 1.000000e+00 : f32
    %44 = vector.broadcast %cst_15 : f32 to vector<8x32xf32>
    %45 = arith.subf %43, %44 : vector<8x32xf32>
    %46 = vector.extract_strided_slice %38 {offsets = [0, 96], sizes = [8, 32], strides = [1, 1]} : vector<8x128xf32> to vector<8x32xf32>
    %47 = arith.mulf %40, %26 : vector<8x32xf32>
    %48 = arith.mulf %39, %45 : vector<8x32xf32>
    %49 = arith.addf %47, %48 : vector<8x32xf32>
    %50 = math.tanh %49 : vector<8x32xf32>
    %51 = arith.mulf %46, %50 : vector<8x32xf32>
    %52 = arith.maximumf %29, %51 : vector<8x32xf32>
    %53 = vector.extract_strided_slice %2 {offsets = [16, 0], sizes = [8, 128], strides = [1, 1]} : vector<64x128xf32> to vector<8x128xf32>
    %54 = arith.truncf %51 : vector<8x32xf32> to vector<8x32xbf16>
    %cst_16 = arith.constant dense<0.000000e+00> : vector<8x128xf32>
    %55 = tpu.matmul %54, %3, %cst_16 {dimension_numbers = #tpu.dot_dimension_numbers<[1], [0], [0], [1], [0, 0, 1, 1], [], []>} : vector<8x32xbf16>, vector<32x128xbf16>, vector<8x128xf32> -> vector<8x128xf32>
    %56 = arith.addf %53, %55 : vector<8x128xf32>
    %57 = arith.negf %56 : vector<8x128xf32>
    %58 = math.exp %57 : vector<8x128xf32>
    %cst_17 = arith.constant 1.000000e+00 : f32
    %59 = vector.broadcast %cst_17 : f32 to vector<8x128xf32>
    %60 = arith.addf %59, %58 : vector<8x128xf32>
    %61 = arith.divf %59, %60 : vector<8x128xf32>
    %62 = vector.extract_strided_slice %61 {offsets = [0, 0], sizes = [8, 32], strides = [1, 1]} : vector<8x128xf32> to vector<8x32xf32>
    %63 = vector.extract_strided_slice %61 {offsets = [0, 32], sizes = [8, 32], strides = [1, 1]} : vector<8x128xf32> to vector<8x32xf32>
    %64 = vector.extract_strided_slice %61 {offsets = [0, 64], sizes = [8, 32], strides = [1, 1]} : vector<8x128xf32> to vector<8x32xf32>
    %cst_18 = arith.constant 2.000000e+00 : f32
    %65 = vector.broadcast %cst_18 : f32 to vector<8x32xf32>
    %66 = arith.mulf %65, %64 : vector<8x32xf32>
    %cst_19 = arith.constant 1.000000e+00 : f32
    %67 = vector.broadcast %cst_19 : f32 to vector<8x32xf32>
    %68 = arith.subf %66, %67 : vector<8x32xf32>
    %69 = vector.extract_strided_slice %61 {offsets = [0, 96], sizes = [8, 32], strides = [1, 1]} : vector<8x128xf32> to vector<8x32xf32>
    %70 = arith.mulf %63, %49 : vector<8x32xf32>
    %71 = arith.mulf %62, %68 : vector<8x32xf32>
    %72 = arith.addf %70, %71 : vector<8x32xf32>
    %73 = math.tanh %72 : vector<8x32xf32>
    %74 = arith.mulf %69, %73 : vector<8x32xf32>
    %75 = arith.maximumf %52, %74 : vector<8x32xf32>
    %76 = vector.extract_strided_slice %2 {offsets = [24, 0], sizes = [8, 128], strides = [1, 1]} : vector<64x128xf32> to vector<8x128xf32>
    %77 = arith.truncf %74 : vector<8x32xf32> to vector<8x32xbf16>
    %cst_20 = arith.constant dense<0.000000e+00> : vector<8x128xf32>
    %78 = tpu.matmul %77, %3, %cst_20 {dimension_numbers = #tpu.dot_dimension_numbers<[1], [0], [0], [1], [0, 0, 1, 1], [], []>} : vector<8x32xbf16>, vector<32x128xbf16>, vector<8x128xf32> -> vector<8x128xf32>
    %79 = arith.addf %76, %78 : vector<8x128xf32>
    %80 = arith.negf %79 : vector<8x128xf32>
    %81 = math.exp %80 : vector<8x128xf32>
    %cst_21 = arith.constant 1.000000e+00 : f32
    %82 = vector.broadcast %cst_21 : f32 to vector<8x128xf32>
    %83 = arith.addf %82, %81 : vector<8x128xf32>
    %84 = arith.divf %82, %83 : vector<8x128xf32>
    %85 = vector.extract_strided_slice %84 {offsets = [0, 0], sizes = [8, 32], strides = [1, 1]} : vector<8x128xf32> to vector<8x32xf32>
    %86 = vector.extract_strided_slice %84 {offsets = [0, 32], sizes = [8, 32], strides = [1, 1]} : vector<8x128xf32> to vector<8x32xf32>
    %87 = vector.extract_strided_slice %84 {offsets = [0, 64], sizes = [8, 32], strides = [1, 1]} : vector<8x128xf32> to vector<8x32xf32>
    %cst_22 = arith.constant 2.000000e+00 : f32
    %88 = vector.broadcast %cst_22 : f32 to vector<8x32xf32>
    %89 = arith.mulf %88, %87 : vector<8x32xf32>
    %cst_23 = arith.constant 1.000000e+00 : f32
    %90 = vector.broadcast %cst_23 : f32 to vector<8x32xf32>
    %91 = arith.subf %89, %90 : vector<8x32xf32>
    %92 = vector.extract_strided_slice %84 {offsets = [0, 96], sizes = [8, 32], strides = [1, 1]} : vector<8x128xf32> to vector<8x32xf32>
    %93 = arith.mulf %86, %72 : vector<8x32xf32>
    %94 = arith.mulf %85, %91 : vector<8x32xf32>
    %95 = arith.addf %93, %94 : vector<8x32xf32>
    %96 = math.tanh %95 : vector<8x32xf32>
    %97 = arith.mulf %92, %96 : vector<8x32xf32>
    %98 = arith.maximumf %75, %97 : vector<8x32xf32>
    %99 = vector.extract_strided_slice %2 {offsets = [32, 0], sizes = [8, 128], strides = [1, 1]} : vector<64x128xf32> to vector<8x128xf32>
    %100 = arith.truncf %97 : vector<8x32xf32> to vector<8x32xbf16>
    %cst_24 = arith.constant dense<0.000000e+00> : vector<8x128xf32>
    %101 = tpu.matmul %100, %3, %cst_24 {dimension_numbers = #tpu.dot_dimension_numbers<[1], [0], [0], [1], [0, 0, 1, 1], [], []>} : vector<8x32xbf16>, vector<32x128xbf16>, vector<8x128xf32> -> vector<8x128xf32>
    %102 = arith.addf %99, %101 : vector<8x128xf32>
    %103 = arith.negf %102 : vector<8x128xf32>
    %104 = math.exp %103 : vector<8x128xf32>
    %cst_25 = arith.constant 1.000000e+00 : f32
    %105 = vector.broadcast %cst_25 : f32 to vector<8x128xf32>
    %106 = arith.addf %105, %104 : vector<8x128xf32>
    %107 = arith.divf %105, %106 : vector<8x128xf32>
    %108 = vector.extract_strided_slice %107 {offsets = [0, 0], sizes = [8, 32], strides = [1, 1]} : vector<8x128xf32> to vector<8x32xf32>
    %109 = vector.extract_strided_slice %107 {offsets = [0, 32], sizes = [8, 32], strides = [1, 1]} : vector<8x128xf32> to vector<8x32xf32>
    %110 = vector.extract_strided_slice %107 {offsets = [0, 64], sizes = [8, 32], strides = [1, 1]} : vector<8x128xf32> to vector<8x32xf32>
    %cst_26 = arith.constant 2.000000e+00 : f32
    %111 = vector.broadcast %cst_26 : f32 to vector<8x32xf32>
    %112 = arith.mulf %111, %110 : vector<8x32xf32>
    %cst_27 = arith.constant 1.000000e+00 : f32
    %113 = vector.broadcast %cst_27 : f32 to vector<8x32xf32>
    %114 = arith.subf %112, %113 : vector<8x32xf32>
    %115 = vector.extract_strided_slice %107 {offsets = [0, 96], sizes = [8, 32], strides = [1, 1]} : vector<8x128xf32> to vector<8x32xf32>
    %116 = arith.mulf %109, %95 : vector<8x32xf32>
    %117 = arith.mulf %108, %114 : vector<8x32xf32>
    %118 = arith.addf %116, %117 : vector<8x32xf32>
    %119 = math.tanh %118 : vector<8x32xf32>
    %120 = arith.mulf %115, %119 : vector<8x32xf32>
    %121 = arith.maximumf %98, %120 : vector<8x32xf32>
    %122 = vector.extract_strided_slice %2 {offsets = [40, 0], sizes = [8, 128], strides = [1, 1]} : vector<64x128xf32> to vector<8x128xf32>
    %123 = arith.truncf %120 : vector<8x32xf32> to vector<8x32xbf16>
    %cst_28 = arith.constant dense<0.000000e+00> : vector<8x128xf32>
    %124 = tpu.matmul %123, %3, %cst_28 {dimension_numbers = #tpu.dot_dimension_numbers<[1], [0], [0], [1], [0, 0, 1, 1], [], []>} : vector<8x32xbf16>, vector<32x128xbf16>, vector<8x128xf32> -> vector<8x128xf32>
    %125 = arith.addf %122, %124 : vector<8x128xf32>
    %126 = arith.negf %125 : vector<8x128xf32>
    %127 = math.exp %126 : vector<8x128xf32>
    %cst_29 = arith.constant 1.000000e+00 : f32
    %128 = vector.broadcast %cst_29 : f32 to vector<8x128xf32>
    %129 = arith.addf %128, %127 : vector<8x128xf32>
    %130 = arith.divf %128, %129 : vector<8x128xf32>
    %131 = vector.extract_strided_slice %130 {offsets = [0, 0], sizes = [8, 32], strides = [1, 1]} : vector<8x128xf32> to vector<8x32xf32>
    %132 = vector.extract_strided_slice %130 {offsets = [0, 32], sizes = [8, 32], strides = [1, 1]} : vector<8x128xf32> to vector<8x32xf32>
    %133 = vector.extract_strided_slice %130 {offsets = [0, 64], sizes = [8, 32], strides = [1, 1]} : vector<8x128xf32> to vector<8x32xf32>
    %cst_30 = arith.constant 2.000000e+00 : f32
    %134 = vector.broadcast %cst_30 : f32 to vector<8x32xf32>
    %135 = arith.mulf %134, %133 : vector<8x32xf32>
    %cst_31 = arith.constant 1.000000e+00 : f32
    %136 = vector.broadcast %cst_31 : f32 to vector<8x32xf32>
    %137 = arith.subf %135, %136 : vector<8x32xf32>
    %138 = vector.extract_strided_slice %130 {offsets = [0, 96], sizes = [8, 32], strides = [1, 1]} : vector<8x128xf32> to vector<8x32xf32>
    %139 = arith.mulf %132, %118 : vector<8x32xf32>
    %140 = arith.mulf %131, %137 : vector<8x32xf32>
    %141 = arith.addf %139, %140 : vector<8x32xf32>
    %142 = math.tanh %141 : vector<8x32xf32>
    %143 = arith.mulf %138, %142 : vector<8x32xf32>
    %144 = arith.maximumf %121, %143 : vector<8x32xf32>
    %145 = vector.extract_strided_slice %2 {offsets = [48, 0], sizes = [8, 128], strides = [1, 1]} : vector<64x128xf32> to vector<8x128xf32>
    %146 = arith.truncf %143 : vector<8x32xf32> to vector<8x32xbf16>
    %cst_32 = arith.constant dense<0.000000e+00> : vector<8x128xf32>
    %147 = tpu.matmul %146, %3, %cst_32 {dimension_numbers = #tpu.dot_dimension_numbers<[1], [0], [0], [1], [0, 0, 1, 1], [], []>} : vector<8x32xbf16>, vector<32x128xbf16>, vector<8x128xf32> -> vector<8x128xf32>
    %148 = arith.addf %145, %147 : vector<8x128xf32>
    %149 = arith.negf %148 : vector<8x128xf32>
    %150 = math.exp %149 : vector<8x128xf32>
    %cst_33 = arith.constant 1.000000e+00 : f32
    %151 = vector.broadcast %cst_33 : f32 to vector<8x128xf32>
    %152 = arith.addf %151, %150 : vector<8x128xf32>
    %153 = arith.divf %151, %152 : vector<8x128xf32>
    %154 = vector.extract_strided_slice %153 {offsets = [0, 0], sizes = [8, 32], strides = [1, 1]} : vector<8x128xf32> to vector<8x32xf32>
    %155 = vector.extract_strided_slice %153 {offsets = [0, 32], sizes = [8, 32], strides = [1, 1]} : vector<8x128xf32> to vector<8x32xf32>
    %156 = vector.extract_strided_slice %153 {offsets = [0, 64], sizes = [8, 32], strides = [1, 1]} : vector<8x128xf32> to vector<8x32xf32>
    %cst_34 = arith.constant 2.000000e+00 : f32
    %157 = vector.broadcast %cst_34 : f32 to vector<8x32xf32>
    %158 = arith.mulf %157, %156 : vector<8x32xf32>
    %cst_35 = arith.constant 1.000000e+00 : f32
    %159 = vector.broadcast %cst_35 : f32 to vector<8x32xf32>
    %160 = arith.subf %158, %159 : vector<8x32xf32>
    %161 = vector.extract_strided_slice %153 {offsets = [0, 96], sizes = [8, 32], strides = [1, 1]} : vector<8x128xf32> to vector<8x32xf32>
    %162 = arith.mulf %155, %141 : vector<8x32xf32>
    %163 = arith.mulf %154, %160 : vector<8x32xf32>
    %164 = arith.addf %162, %163 : vector<8x32xf32>
    %165 = math.tanh %164 : vector<8x32xf32>
    %166 = arith.mulf %161, %165 : vector<8x32xf32>
    %167 = arith.maximumf %144, %166 : vector<8x32xf32>
    %168 = vector.extract_strided_slice %2 {offsets = [56, 0], sizes = [8, 128], strides = [1, 1]} : vector<64x128xf32> to vector<8x128xf32>
    %169 = arith.truncf %166 : vector<8x32xf32> to vector<8x32xbf16>
    %cst_36 = arith.constant dense<0.000000e+00> : vector<8x128xf32>
    %170 = tpu.matmul %169, %3, %cst_36 {dimension_numbers = #tpu.dot_dimension_numbers<[1], [0], [0], [1], [0, 0, 1, 1], [], []>} : vector<8x32xbf16>, vector<32x128xbf16>, vector<8x128xf32> -> vector<8x128xf32>
    %171 = arith.addf %168, %170 : vector<8x128xf32>
    %172 = arith.negf %171 : vector<8x128xf32>
    %173 = math.exp %172 : vector<8x128xf32>
    %cst_37 = arith.constant 1.000000e+00 : f32
    %174 = vector.broadcast %cst_37 : f32 to vector<8x128xf32>
    %175 = arith.addf %174, %173 : vector<8x128xf32>
    %176 = arith.divf %174, %175 : vector<8x128xf32>
    %177 = vector.extract_strided_slice %176 {offsets = [0, 0], sizes = [8, 32], strides = [1, 1]} : vector<8x128xf32> to vector<8x32xf32>
    %178 = vector.extract_strided_slice %176 {offsets = [0, 32], sizes = [8, 32], strides = [1, 1]} : vector<8x128xf32> to vector<8x32xf32>
    %179 = vector.extract_strided_slice %176 {offsets = [0, 64], sizes = [8, 32], strides = [1, 1]} : vector<8x128xf32> to vector<8x32xf32>
    %cst_38 = arith.constant 2.000000e+00 : f32
    %180 = vector.broadcast %cst_38 : f32 to vector<8x32xf32>
    %181 = arith.mulf %180, %179 : vector<8x32xf32>
    %cst_39 = arith.constant 1.000000e+00 : f32
    %182 = vector.broadcast %cst_39 : f32 to vector<8x32xf32>
    %183 = arith.subf %181, %182 : vector<8x32xf32>
    %184 = vector.extract_strided_slice %176 {offsets = [0, 96], sizes = [8, 32], strides = [1, 1]} : vector<8x128xf32> to vector<8x32xf32>
    %185 = arith.mulf %178, %164 : vector<8x32xf32>
    %186 = arith.mulf %177, %183 : vector<8x32xf32>
    %187 = arith.addf %185, %186 : vector<8x32xf32>
    %188 = math.tanh %187 : vector<8x32xf32>
    %189 = arith.mulf %184, %188 : vector<8x32xf32>
    %190 = arith.maximumf %167, %189 : vector<8x32xf32>
    %191 = math.tanh %190 : vector<8x32xf32>
    %192 = arith.truncf %191 : vector<8x32xf32> to vector<8x32xbf16>
    %c0_40 = arith.constant 0 : index
    %c0_41 = arith.constant 0 : index
    %193 = vector.load %arg3[%c0_40, %c0_41] : memref<32x5xbf16, #tpu.memory_space<vmem>>, vector<32x5xbf16>
    %cst_42 = arith.constant dense<0.000000e+00> : vector<8x5xf32>
    %194 = tpu.matmul %192, %193, %cst_42 {dimension_numbers = #tpu.dot_dimension_numbers<[1], [0], [0], [1], [0, 0, 1, 1], [], []>} : vector<8x32xbf16>, vector<32x5xbf16>, vector<8x5xf32> -> vector<8x5xf32>
    %c0_43 = arith.constant 0 : index
    %c0_44 = arith.constant 0 : index
    %195 = vector.load %arg4[%c0_43, %c0_44] : memref<1x5xf32, #tpu.memory_space<vmem>>, vector<1x5xf32>
    %196 = vector.broadcast %195 : vector<1x5xf32> to vector<8x5xf32>
    %197 = arith.addf %194, %196 : vector<8x5xf32>
    %c0_45 = arith.constant 0 : index
    %c0_46 = arith.constant 0 : index
    %198 = vector.load %arg5[%c0_45, %c0_46] : memref<8x5xf32, #tpu.memory_space<vmem>>, vector<8x5xf32>
    tpu.vector_store %arg5[%c0_45, %c0_46], %197 {strides = array<i32>} : memref<8x5xf32, #tpu.memory_space<vmem>>, vector<8x5xf32>,
    return
  }
}

</mosaic_0001>

<llo_original>
// kernel: tpu_custom_call.1
$region0: #{tpu_custom_call.1}
  #allocation0 [shape = 'u32[]', space=smem, size = 0x4, offset = 0x4, fixed_abs, tag = 'smem constant byte address 0x4 - core index']
  #allocation1 [shape = 'u32[144,128]{1,0:T(1,128)}', space=vmem, size = 0x12000, scoped, tag = 'internal scratch']
  %s0 = inlined_call_operand.vmem [shape: bf16[64,32], index: 0, kind: input, shape index: {}]
  %s1 = inlined_call_operand.vmem [shape: bf16[32,128], index: 1, kind: input, shape index: {}]
  %s2 = inlined_call_operand.vmem [shape: bf16[32,128], index: 2, kind: input, shape index: {}]
  %s3 = inlined_call_operand.vmem [shape: bf16[32,5], index: 3, kind: input, shape index: {}]
  %s4 = inlined_call_operand.vmem [shape: f32[1,5], index: 4, kind: input, shape index: {}]
  %s5 = inlined_call_operand.hbm [shape: f32[8,5], index: 5, kind: output, shape index: {}]
  %s6 = sld [smem:[#allocation0]]
  $region30: #{tpu_custom_call.1} parent=0
    _
  %s8 = ssub.s32 1, %s6
  %s9 = scalar_select 0, %s8, %s6
  $region1: #{tpu_custom_call.1} parent=0
    #allocation2 [shape = 'u8[4096]{0}', space=vmem, size = 0x1000, scoped, tag = 'output window, operand 0, single buffered']
    #allocation3 [shape = 's32[1]{0}', space=sflag, size = 0x4, scoped, tag = 'scoped memory for tpu_custom_call.1']
    %10 = vsyncpa [#allocation3], 0
    // Predicated region
    $region2: #{tpu_custom_call.1} parent=1 // pred_check
      _
    $region3: #{tpu_custom_call.1} parent=1 // pred_check_branch
      %12 = sbr.rel (0) target = $region5
    $region4: #{tpu_custom_call.1} parent=1 // pred_region
      _
    $region5: #{tpu_custom_call.1} parent=1 // pred_fallthru
      _
    // Predicated region
    $region6: #{tpu_custom_call.1} parent=1 // pred_check
      _
    $region7: #{tpu_custom_call.1} parent=1 // pred_check_branch
      %14 = sbr.rel (0) target = $region9
    $region8: #{tpu_custom_call.1} parent=1 // pred_region
      _
    $region9: #{tpu_custom_call.1} parent=1 // pred_fallthru
      _
    // Predicated region
    $region10: #{tpu_custom_call.1} parent=1 // pred_check
      _
    $region11: #{tpu_custom_call.1} parent=1 // pred_check_branch
      %16 = sbr.rel (0) target = $region13
    $region12: #{tpu_custom_call.1} parent=1 // pred_region
      _
    $region13: #{tpu_custom_call.1} parent=1 // pred_fallthru
      _
    // Predicated region
    $region14: #{tpu_custom_call.1} parent=1 // pred_check
      _
    $region15: #{tpu_custom_call.1} parent=1 // pred_check_branch
      %18 = sbr.rel (0) target = $region17
    $region16: #{tpu_custom_call.1} parent=1 // pred_region
      _
    $region17: #{tpu_custom_call.1} parent=1 // pred_fallthru
      _
    // Predicated region
    $region18: #{tpu_custom_call.1} parent=1 // pred_check
      _
    $region19: #{tpu_custom_call.1} parent=1 // pred_check_branch
      %20 = sbr.rel (0) target = $region21
    $region20: #{tpu_custom_call.1} parent=1 // pred_region
      _
    $region21: #{tpu_custom_call.1} parent=1 // pred_fallthru
      _
    %v22 = vld [vmem:[%s0] sm:$0xf]
    %v23 = vld [vmem:[%s0 + $0x4] sm:$0xf]
    %v24 = vld [vmem:[%s0 + $0x8] sm:$0xf]
    %v25 = vld [vmem:[%s0 + $0xc] sm:$0xf]
    %v26 = vld [vmem:[%s0 + $0x10] sm:$0xf]
    %v27 = vld [vmem:[%s0 + $0x14] sm:$0xf]
    %v28 = vld [vmem:[%s0 + $0x18] sm:$0xf]
    %v29 = vld [vmem:[%s0 + $0x1c] sm:$0xf]
    %v30 = vld [vmem:[%s1] sm:$0xf]
    %v31 = vld [vmem:[%s1 + $0x4] sm:$0xf]
    %v32 = vld [vmem:[%s1 + $0x8] sm:$0xf]
    %v33 = vld [vmem:[%s1 + $0xc] sm:$0xf]
    %v42 = vunpack.c.l.b16 %v22
    %v43 = vunpack.c.l.b16 %v23
    %v44 = vunpack.c.l.b16 %v24
    %v45 = vunpack.c.l.b16 %v25
    %v46 = vunpack.c.l.b16 %v26
    %v47 = vunpack.c.l.b16 %v27
    %v48 = vunpack.c.l.b16 %v28
    %v49 = vunpack.c.l.b16 %v29
    %v50 = vpack.c.b16 %v43, %v42
    %v51 = vpack.c.b16 %v45, %v44
    %v52 = vpack.c.b16 %v47, %v46
    %v53 = vpack.c.b16 %v49, %v48
    %v58 = vunpack.c.l.b16 %v30
    %v59 = vunpack.c.l.b16 %v31
    %v60 = vunpack.c.l.b16 %v32
    %v61 = vunpack.c.l.b16 %v33
    %v62 = vpack.c.b16 %v59, %v58
    %v63 = vpack.c.b16 %v61, %v60
    %vm66 = vcmask 261120
    %v68 = vsel %vm66, %v50, 0
    %v71 = vsel %vm66, %v51, 0
    %v74 = vsel %vm66, %v52, 0
    %v77 = vsel %vm66, %v53, 0
    %79 = vmatprep.subr.bf16.mxu0 0
    %80 = vmatpush1.bf16.msra.mxu0 %v62
    %81 = vmatprep.subr.bf16.mxu0 0
    %82 = vmatpush1.bf16.msra.mxu0 %v63
    %83 = vmatprep.subr.bf16.mxu0 0
    %84 = vmatpush1.bf16.msra.mxu0 0
    %85 = vmatprep.subr.bf16.mxu0 0
    %86 = vmatpush1.bf16.msra.mxu0 0
    %87 = vmatprep.subr.bf16.mxu0 0
    %88 = vmatpush1.bf16.msra.mxu0 0
    %89 = vmatprep.subr.bf16.mxu0 0
    %90 = vmatpush1.bf16.msra.mxu0 0
    %91 = vmatprep.subr.bf16.mxu0 0
    %92 = vmatpush1.bf16.msra.mxu0 0
    %93 = vmatprep.subr.bf16.mxu0 0
    %94 = vmatpush1.bf16.msra.mxu0 0
    %95 = vmatprep.subr.bf16.mxu0 0
    %96 = vmatpush1.bf16.msra.mxu0 0
    %97 = vmatprep.subr.bf16.mxu0 0
    %98 = vmatpush1.bf16.msra.mxu0 0
    %99 = vmatprep.subr.bf16.mxu0 0
    %100 = vmatpush1.bf16.msra.mxu0 0
    %101 = vmatprep.subr.bf16.mxu0 0
    %102 = vmatpush1.bf16.msra.mxu0 0
    %103 = vmatprep.subr.bf16.mxu0 0
    %104 = vmatpush1.bf16.msra.mxu0 0
    %105 = vmatprep.subr.bf16.mxu0 0
    %106 = vmatpush1.bf16.msra.mxu0 0
    %107 = vmatprep.subr.bf16.mxu0 0
    %108 = vmatpush1.bf16.msra.mxu0 0
    %109 = vmatprep.subr.bf16.mxu0 0
    %110 = vmatpush1.bf16.msra.mxu0 0
    %111 = vmatprep.mubr.bf16.mxu0 0
    %112 = vmatmul.mubr.bf16.gmra.mrb[0].mxu0 %v68
    %v113 = vpop.f32.mrb[0].mxu0
    %v114 = vadd.f32 0.0, %v113
    %v115 = vpop.f32.mrb[0].mxu0
    %v116 = vpop.f32.mrb[0].mxu0
    %v117 = vadd.f32 0.0, %v116
    %v118 = vpop.f32.mrb[0].mxu0
    %119 = vmatprep.mubr.bf16.mxu0 0
    %120 = vmatmul.mubr.bf16.gmra.mrb[0].mxu0 %v71
    %v121 = vpop.f32.mrb[0].mxu0
    %v122 = vadd.f32 0.0, %v121
    %v123 = vpop.f32.mrb[0].mxu0
    %v124 = vpop.f32.mrb[0].mxu0
    %v125 = vadd.f32 0.0, %v124
    %v126 = vpop.f32.mrb[0].mxu0
    %127 = vmatprep.mubr.bf16.mxu0 0
    %128 = vmatmul.mubr.bf16.gmra.mrb[0].mxu0 %v74
    %v129 = vpop.f32.mrb[0].mxu0
    %v130 = vadd.f32 0.0, %v129
    %v131 = vpop.f32.mrb[0].mxu0
    %v132 = vpop.f32.mrb[0].mxu0
    %v133 = vadd.f32 0.0, %v132
    %v134 = vpop.f32.mrb[0].mxu0
    %135 = vmatprep.mubr.bf16.mxu0 0
    %136 = vmatmul.mubr.bf16.gmra.mrb[0].mxu0 %v77
    %v137 = vpop.f32.mrb[0].mxu0
    %v138 = vadd.f32 0.0, %v137
    %v139 = vpop.f32.mrb[0].mxu0
    %v140 = vpop.f32.mrb[0].mxu0
    %v141 = vadd.f32 0.0, %v140
    %v142 = vpop.f32.mrb[0].mxu0
    %143 = vdwg.mxu0
    %v144 = vld [vmem:[%s2] sm:$0xf]
    %v145 = vld [vmem:[%s2 + $0x4] sm:$0xf]
    %v146 = vld [vmem:[%s2 + $0x8] sm:$0xf]
    %v147 = vld [vmem:[%s2 + $0xc] sm:$0xf]
    %v152 = vunpack.c.l.b16 %v144
    %v153 = vunpack.c.l.b16 %v145
    %v154 = vunpack.c.l.b16 %v146
    %v155 = vunpack.c.l.b16 %v147
    %v156 = vpack.c.b16 %v153, %v152
    %v157 = vpack.c.b16 %v155, %v154
    %v161 = vsel %vm66, 0, 0
    %163 = vmatprep.subr.bf16.mxu0 0
    %164 = vmatpush1.bf16.msra.mxu0 %v156
    %165 = vmatprep.subr.bf16.mxu0 0
    %166 = vmatpush1.bf16.msra.mxu0 %v157
    %167 = vmatprep.subr.bf16.mxu0 0
    %168 = vmatpush1.bf16.msra.mxu0 0
    %169 = vmatprep.subr.bf16.mxu0 0
    %170 = vmatpush1.bf16.msra.mxu0 0
    %171 = vmatprep.subr.bf16.mxu0 0
    %172 = vmatpush1.bf16.msra.mxu0 0
    %173 = vmatprep.subr.bf16.mxu0 0
    %174 = vmatpush1.bf16.msra.mxu0 0
    %175 = vmatprep.subr.bf16.mxu0 0
    %176 = vmatpush1.bf16.msra.mxu0 0
    %177 = vmatprep.subr.bf16.mxu0 0
    %178 = vmatpush1.bf16.msra.mxu0 0
    %179 = vmatprep.subr.bf16.mxu0 0
    %180 = vmatpush1.bf16.msra.mxu0 0
    %181 = vmatprep.subr.bf16.mxu0 0
    %182 = vmatpush1.bf16.msra.mxu0 0
    %183 = vmatprep.subr.bf16.mxu0 0
    %184 = vmatpush1.bf16.msra.mxu0 0
    %185 = vmatprep.subr.bf16.mxu0 0
    %186 = vmatpush1.bf16.msra.mxu0 0
    %187 = vmatprep.subr.bf16.mxu0 0
    %188 = vmatpush1.bf16.msra.mxu0 0
    %189 = vmatprep.subr.bf16.mxu0 0
    %190 = vmatpush1.bf16.msra.mxu0 0
    %191 = vmatprep.subr.bf16.mxu0 0
    %192 = vmatpush1.bf16.msra.mxu0 0
    %193 = vmatprep.subr.bf16.mxu0 0
    %194 = vmatpush1.bf16.msra.mxu0 0
    %195 = vmatprep.mubr.bf16.mxu0 0
    %196 = vmatmul.mubr.bf16.gmra.mrb[0].mxu0 %v161
    %v197 = vpop.f32.mrb[0].mxu0
    %v198 = vadd.f32 0.0, %v197
    %v199 = vpop.f32.mrb[0].mxu0
    %v200 = vpop.f32.mrb[0].mxu0
    %v201 = vpop.f32.mrb[0].mxu0
    %202 = vdwg.mxu0
    %v203 = vadd.f32 %v114, %v198
    %v204 = vxor.u32 %v203, 2147483648
    %v205 = vmul.f32 %v204, 1.442695
    %v206 = vpow.pop %v205
    %v207 = vadd.f32 %v206, 1.0
    %v208 = vrcp.pop %v207
    %v209 = vmul.f32 1.0, %v208
    %v210 = vmul.f32 %v209, 2.0
    %v211 = vsub.f32 %v210, 1.0
    %v212 = vmul.f32 %v209, 0.0
    %214 = vrot.lane.b32.xlu0 %v211, 64
    %v215 = vpop.permute.xlu0 %214
    %v217 = vmul.f32 %v209, %v215
    %219 = vrot.lane.b32.xlu0 %v217, 32
    %v220 = vpop.permute.xlu0 %219
    %v222 = vadd.f32 %v212, %v220
    %v223 = vtanh.pop %v222
    %225 = vrot.lane.b32.xlu0 %v223, 64
    %v226 = vpop.permute.xlu0 %225
    %v228 = vmul.f32 %v209, %v226
    %v229 = vmax.f32 %v228, -1.0
    %v230 = vpack.c.bf16 %v228, %v228
    %232 = vrot.lane.b32.xlu0 %v230, 32
    %v233 = vpop.permute.xlu0 %232
    %v235 = vsel %vm66, %v233, 0
    %237 = vmatprep.subr.bf16.mxu0 0
    %238 = vmatpush1.bf16.msra.mxu0 %v156
    %239 = vmatprep.subr.bf16.mxu0 0
    %240 = vmatpush1.bf16.msra.mxu0 %v157
    %241 = vmatprep.subr.bf16.mxu0 0
    %242 = vmatpush1.bf16.msra.mxu0 0
    %243 = vmatprep.subr.bf16.mxu0 0
    %244 = vmatpush1.bf16.msra.mxu0 0
    %245 = vmatprep.subr.bf16.mxu0 0
    %246 = vmatpush1.bf16.msra.mxu0 0
    %247 = vmatprep.subr.bf16.mxu0 0
    %248 = vmatpush1.bf16.msra.mxu0 0
    %249 = vmatprep.subr.bf16.mxu0 0
    %250 = vmatpush1.bf16.msra.mxu0 0
    %251 = vmatprep.subr.bf16.mxu0 0
    %252 = vmatpush1.bf16.msra.mxu0 0
    %253 = vmatprep.subr.bf16.mxu0 0
    %254 = vmatpush1.bf16.msra.mxu0 0
    %255 = vmatprep.subr.bf16.mxu0 0
    %256 = vmatpush1.bf16.msra.mxu0 0
    %257 = vmatprep.subr.bf16.mxu0 0
    %258 = vmatpush1.bf16.msra.mxu0 0
    %259 = vmatprep.subr.bf16.mxu0 0
    %260 = vmatpush1.bf16.msra.mxu0 0
    %261 = vmatprep.subr.bf16.mxu0 0
    %262 = vmatpush1.bf16.msra.mxu0 0
    %263 = vmatprep.subr.bf16.mxu0 0
    %264 = vmatpush1.bf16.msra.mxu0 0
    %265 = vmatprep.subr.bf16.mxu0 0
    %266 = vmatpush1.bf16.msra.mxu0 0
    %267 = vmatprep.subr.bf16.mxu0 0
    %268 = vmatpush1.bf16.msra.mxu0 0
    %269 = vmatprep.mubr.bf16.mxu0 0
    %270 = vmatmul.mubr.bf16.gmra.mrb[0].mxu0 %v235
    %v271 = vpop.f32.mrb[0].mxu0
    %v272 = vadd.f32 0.0, %v271
    %v273 = vpop.f32.mrb[0].mxu0
    %v274 = vpop.f32.mrb[0].mxu0
    %v275 = vpop.f32.mrb[0].mxu0
    %276 = vdwg.mxu0
    %v277 = vadd.f32 %v117, %v272
    %v278 = vxor.u32 %v277, 2147483648
    %v279 = vmul.f32 %v278, 1.442695
    %v280 = vpow.pop %v279
    %v281 = vadd.f32 %v280, 1.0
    %v282 = vrcp.pop %v281
    %v283 = vmul.f32 1.0, %v282
    %v284 = vmul.f32 %v283, 2.0
    %v285 = vsub.f32 %v284, 1.0
    %v286 = vmul.f32 %v283, %v222
    %288 = vrot.lane.b32.xlu0 %v285, 64
    %v289 = vpop.permute.xlu0 %288
    %v291 = vmul.f32 %v283, %v289
    %293 = vrot.lane.b32.xlu0 %v291, 32
    %v294 = vpop.permute.xlu0 %293
    %v296 = vadd.f32 %v286, %v294
    %v297 = vtanh.pop %v296
    %299 = vrot.lane.b32.xlu0 %v297, 64
    %v300 = vpop.permute.xlu0 %299
    %v302 = vmul.f32 %v283, %v300
    %v303 = vmax.f32 %v229, %v302
    %v304 = vpack.c.bf16 %v302, %v302
    %306 = vrot.lane.b32.xlu0 %v304, 32
    %v307 = vpop.permute.xlu0 %306
    %v309 = vsel %vm66, %v307, 0
    %311 = vmatprep.subr.bf16.mxu0 0
    %312 = vmatpush1.bf16.msra.mxu0 %v156
    %313 = vmatprep.subr.bf16.mxu0 0
    %314 = vmatpush1.bf16.msra.mxu0 %v157
    %315 = vmatprep.subr.bf16.mxu0 0
    %316 = vmatpush1.bf16.msra.mxu0 0
    %317 = vmatprep.subr.bf16.mxu0 0
    %318 = vmatpush1.bf16.msra.mxu0 0
    %319 = vmatprep.subr.bf16.mxu0 0
    %320 = vmatpush1.bf16.msra.mxu0 0
    %321 = vmatprep.subr.bf16.mxu0 0
    %322 = vmatpush1.bf16.msra.mxu0 0
    %323 = vmatprep.subr.bf16.mxu0 0
    %324 = vmatpush1.bf16.msra.mxu0 0
    %325 = vmatprep.subr.bf16.mxu0 0
    %326 = vmatpush1.bf16.msra.mxu0 0
    %327 = vmatprep.subr.bf16.mxu0 0
    %328 = vmatpush1.bf16.msra.mxu0 0
    %329 = vmatprep.subr.bf16.mxu0 0
    %330 = vmatpush1.bf16.msra.mxu0 0
    %331 = vmatprep.subr.bf16.mxu0 0
    %332 = vmatpush1.bf16.msra.mxu0 0
    %333 = vmatprep.subr.bf16.mxu0 0
    %334 = vmatpush1.bf16.msra.mxu0 0
    %335 = vmatprep.subr.bf16.mxu0 0
    %336 = vmatpush1.bf16.msra.mxu0 0
    %337 = vmatprep.subr.bf16.mxu0 0
    %338 = vmatpush1.bf16.msra.mxu0 0
    %339 = vmatprep.subr.bf16.mxu0 0
    %340 = vmatpush1.bf16.msra.mxu0 0
    %341 = vmatprep.subr.bf16.mxu0 0
    %342 = vmatpush1.bf16.msra.mxu0 0
    %343 = vmatprep.mubr.bf16.mxu0 0
    %344 = vmatmul.mubr.bf16.gmra.mrb[0].mxu0 %v309
    %v345 = vpop.f32.mrb[0].mxu0
    %v346 = vadd.f32 0.0, %v345
    %v347 = vpop.f32.mrb[0].mxu0
    %v348 = vpop.f32.mrb[0].mxu0
    %v349 = vpop.f32.mrb[0].mxu0
    %350 = vdwg.mxu0
    %v351 = vadd.f32 %v122, %v346
    %v352 = vxor.u32 %v351, 2147483648
    %v353 = vmul.f32 %v352, 1.442695
    %v354 = vpow.pop %v353
    %v355 = vadd.f32 %v354, 1.0
    %v356 = vrcp.pop %v355
    %v357 = vmul.f32 1.0, %v356
    %v358 = vmul.f32 %v357, 2.0
    %v359 = vsub.f32 %v358, 1.0
    %v360 = vmul.f32 %v357, %v296
    %362 = vrot.lane.b32.xlu0 %v359, 64
    %v363 = vpop.permute.xlu0 %362
    %v365 = vmul.f32 %v357, %v363
    %367 = vrot.lane.b32.xlu0 %v365, 32
    %v368 = vpop.permute.xlu0 %367
    %v370 = vadd.f32 %v360, %v368
    %v371 = vtanh.pop %v370
    %373 = vrot.lane.b32.xlu0 %v371, 64
    %v374 = vpop.permute.xlu0 %373
    %v376 = vmul.f32 %v357, %v374
    %v377 = vmax.f32 %v303, %v376
    %v378 = vpack.c.bf16 %v376, %v376
    %380 = vrot.lane.b32.xlu0 %v378, 32
    %v381 = vpop.permute.xlu0 %380
    %v383 = vsel %vm66, %v381, 0
    %385 = vmatprep.subr.bf16.mxu0 0
    %386 = vmatpush1.bf16.msra.mxu0 %v156
    %387 = vmatprep.subr.bf16.mxu0 0
    %388 = vmatpush1.bf16.msra.mxu0 %v157
    %389 = vmatprep.subr.bf16.mxu0 0
    %390 = vmatpush1.bf16.msra.mxu0 0
    %391 = vmatprep.subr.bf16.mxu0 0
    %392 = vmatpush1.bf16.msra.mxu0 0
    %393 = vmatprep.subr.bf16.mxu0 0
    %394 = vmatpush1.bf16.msra.mxu0 0
    %395 = vmatprep.subr.bf16.mxu0 0
    %396 = vmatpush1.bf16.msra.mxu0 0
    %397 = vmatprep.subr.bf16.mxu0 0
    %398 = vmatpush1.bf16.msra.mxu0 0
    %399 = vmatprep.subr.bf16.mxu0 0
    %400 = vmatpush1.bf16.msra.mxu0 0
    %401 = vmatprep.subr.bf16.mxu0 0
    %402 = vmatpush1.bf16.msra.mxu0 0
    %403 = vmatprep.subr.bf16.mxu0 0
    %404 = vmatpush1.bf16.msra.mxu0 0
    %405 = vmatprep.subr.bf16.mxu0 0
    %406 = vmatpush1.bf16.msra.mxu0 0
    %407 = vmatprep.subr.bf16.mxu0 0
    %408 = vmatpush1.bf16.msra.mxu0 0
    %409 = vmatprep.subr.bf16.mxu0 0
    %410 = vmatpush1.bf16.msra.mxu0 0
    %411 = vmatprep.subr.bf16.mxu0 0
    %412 = vmatpush1.bf16.msra.mxu0 0
    %413 = vmatprep.subr.bf16.mxu0 0
    %414 = vmatpush1.bf16.msra.mxu0 0
    %415 = vmatprep.subr.bf16.mxu0 0
    %416 = vmatpush1.bf16.msra.mxu0 0
    %417 = vmatprep.mubr.bf16.mxu0 0
    %418 = vmatmul.mubr.bf16.gmra.mrb[0].mxu0 %v383
    %v419 = vpop.f32.mrb[0].mxu0
    %v420 = vadd.f32 0.0, %v419
    %v421 = vpop.f32.mrb[0].mxu0
    %v422 = vpop.f32.mrb[0].mxu0
    %v423 = vpop.f32.mrb[0].mxu0
    %424 = vdwg.mxu0
    %v425 = vadd.f32 %v125, %v420
    %v426 = vxor.u32 %v425, 2147483648
    %v427 = vmul.f32 %v426, 1.442695
    %v428 = vpow.pop %v427
    %v429 = vadd.f32 %v428, 1.0
    %v430 = vrcp.pop %v429
    %v431 = vmul.f32 1.0, %v430
    %v432 = vmul.f32 %v431, 2.0
    %v433 = vsub.f32 %v432, 1.0
    %v434 = vmul.f32 %v431, %v370
    %436 = vrot.lane.b32.xlu0 %v433, 64
    %v437 = vpop.permute.xlu0 %436
    %v439 = vmul.f32 %v431, %v437
    %441 = vrot.lane.b32.xlu0 %v439, 32
    %v442 = vpop.permute.xlu0 %441
    %v444 = vadd.f32 %v434, %v442
    %v445 = vtanh.pop %v444
    %447 = vrot.lane.b32.xlu0 %v445, 64
    %v448 = vpop.permute.xlu0 %447
    %v450 = vmul.f32 %v431, %v448
    %v451 = vmax.f32 %v377, %v450
    %v452 = vpack.c.bf16 %v450, %v450
    %454 = vrot.lane.b32.xlu0 %v452, 32
    %v455 = vpop.permute.xlu0 %454
    %v457 = vsel %vm66, %v455, 0
    %459 = vmatprep.subr.bf16.mxu0 0
    %460 = vmatpush1.bf16.msra.mxu0 %v156
    %461 = vmatprep.subr.bf16.mxu0 0
    %462 = vmatpush1.bf16.msra.mxu0 %v157
    %463 = vmatprep.subr.bf16.mxu0 0
    %464 = vmatpush1.bf16.msra.mxu0 0
    %465 = vmatprep.subr.bf16.mxu0 0
    %466 = vmatpush1.bf16.msra.mxu0 0
    %467 = vmatprep.subr.bf16.mxu0 0
    %468 = vmatpush1.bf16.msra.mxu0 0
    %469 = vmatprep.subr.bf16.mxu0 0
    %470 = vmatpush1.bf16.msra.mxu0 0
    %471 = vmatprep.subr.bf16.mxu0 0
    %472 = vmatpush1.bf16.msra.mxu0 0
    %473 = vmatprep.subr.bf16.mxu0 0
    %474 = vmatpush1.bf16.msra.mxu0 0
    %475 = vmatprep.subr.bf16.mxu0 0
    %476 = vmatpush1.bf16.msra.mxu0 0
    %477 = vmatprep.subr.bf16.mxu0 0
    %478 = vmatpush1.bf16.msra.mxu0 0
    %479 = vmatprep.subr.bf16.mxu0 0
    %480 = vmatpush1.bf16.msra.mxu0 0
    %481 = vmatprep.subr.bf16.mxu0 0
    %482 = vmatpush1.bf16.msra.mxu0 0
    %483 = vmatprep.subr.bf16.mxu0 0
    %484 = vmatpush1.bf16.msra.mxu0 0
    %485 = vmatprep.subr.bf16.mxu0 0
    %486 = vmatpush1.bf16.msra.mxu0 0
    %487 = vmatprep.subr.bf16.mxu0 0
    %488 = vmatpush1.bf16.msra.mxu0 0
    %489 = vmatprep.subr.bf16.mxu0 0
    %490 = vmatpush1.bf16.msra.mxu0 0
    %491 = vmatprep.mubr.bf16.mxu0 0
    %492 = vmatmul.mubr.bf16.gmra.mrb[0].mxu0 %v457
    %v493 = vpop.f32.mrb[0].mxu0
    %v494 = vadd.f32 0.0, %v493
    %v495 = vpop.f32.mrb[0].mxu0
    %v496 = vpop.f32.mrb[0].mxu0
    %v497 = vpop.f32.mrb[0].mxu0
    %498 = vdwg.mxu0
    %v499 = vadd.f32 %v130, %v494
    %v500 = vxor.u32 %v499, 2147483648
    %v501 = vmul.f32 %v500, 1.442695
    %v502 = vpow.pop %v501
    %v503 = vadd.f32 %v502, 1.0
    %v504 = vrcp.pop %v503
    %v505 = vmul.f32 1.0, %v504
    %v506 = vmul.f32 %v505, 2.0
    %v507 = vsub.f32 %v506, 1.0
    %v508 = vmul.f32 %v505, %v444
    %510 = vrot.lane.b32.xlu0 %v507, 64
    %v511 = vpop.permute.xlu0 %510
    %v513 = vmul.f32 %v505, %v511
    %515 = vrot.lane.b32.xlu0 %v513, 32
    %v516 = vpop.permute.xlu0 %515
    %v518 = vadd.f32 %v508, %v516
    %v519 = vtanh.pop %v518
    %521 = vrot.lane.b32.xlu0 %v519, 64
    %v522 = vpop.permute.xlu0 %521
    %v524 = vmul.f32 %v505, %v522
    %v525 = vmax.f32 %v451, %v524
    %v526 = vpack.c.bf16 %v524, %v524
    %528 = vrot.lane.b32.xlu0 %v526, 32
    %v529 = vpop.permute.xlu0 %528
    %v531 = vsel %vm66, %v529, 0
    %533 = vmatprep.subr.bf16.mxu0 0
    %534 = vmatpush1.bf16.msra.mxu0 %v156
    %535 = vmatprep.subr.bf16.mxu0 0
    %536 = vmatpush1.bf16.msra.mxu0 %v157
    %537 = vmatprep.subr.bf16.mxu0 0
    %538 = vmatpush1.bf16.msra.mxu0 0
    %539 = vmatprep.subr.bf16.mxu0 0
    %540 = vmatpush1.bf16.msra.mxu0 0
    %541 = vmatprep.subr.bf16.mxu0 0
    %542 = vmatpush1.bf16.msra.mxu0 0
    %543 = vmatprep.subr.bf16.mxu0 0
    %544 = vmatpush1.bf16.msra.mxu0 0
    %545 = vmatprep.subr.bf16.mxu0 0
    %546 = vmatpush1.bf16.msra.mxu0 0
    %547 = vmatprep.subr.bf16.mxu0 0
    %548 = vmatpush1.bf16.msra.mxu0 0
    %549 = vmatprep.subr.bf16.mxu0 0
    %550 = vmatpush1.bf16.msra.mxu0 0
    %551 = vmatprep.subr.bf16.mxu0 0
    %552 = vmatpush1.bf16.msra.mxu0 0
    %553 = vmatprep.subr.bf16.mxu0 0
    %554 = vmatpush1.bf16.msra.mxu0 0
    %555 = vmatprep.subr.bf16.mxu0 0
    %556 = vmatpush1.bf16.msra.mxu0 0
    %557 = vmatprep.subr.bf16.mxu0 0
    %558 = vmatpush1.bf16.msra.mxu0 0
    %559 = vmatprep.subr.bf16.mxu0 0
    %560 = vmatpush1.bf16.msra.mxu0 0
    %561 = vmatprep.subr.bf16.mxu0 0
    %562 = vmatpush1.bf16.msra.mxu0 0
    %563 = vmatprep.subr.bf16.mxu0 0
    %564 = vmatpush1.bf16.msra.mxu0 0
    %565 = vmatprep.mubr.bf16.mxu0 0
    %566 = vmatmul.mubr.bf16.gmra.mrb[0].mxu0 %v531
    %v567 = vpop.f32.mrb[0].mxu0
    %v568 = vadd.f32 0.0, %v567
    %v569 = vpop.f32.mrb[0].mxu0
    %v570 = vpop.f32.mrb[0].mxu0
    %v571 = vpop.f32.mrb[0].mxu0
    %572 = vdwg.mxu0
    %v573 = vadd.f32 %v133, %v568
    %v574 = vxor.u32 %v573, 2147483648
    %v575 = vmul.f32 %v574, 1.442695
    %v576 = vpow.pop %v575
    %v577 = vadd.f32 %v576, 1.0
    %v578 = vrcp.pop %v577
    %v579 = vmul.f32 1.0, %v578
    %v580 = vmul.f32 %v579, 2.0
    %v581 = vsub.f32 %v580, 1.0
    %v582 = vmul.f32 %v579, %v518
    %584 = vrot.lane.b32.xlu0 %v581, 64
    %v585 = vpop.permute.xlu0 %584
    %v587 = vmul.f32 %v579, %v585
    %589 = vrot.lane.b32.xlu0 %v587, 32
    %v590 = vpop.permute.xlu0 %589
    %v592 = vadd.f32 %v582, %v590
    %v593 = vtanh.pop %v592
    %595 = vrot.lane.b32.xlu0 %v593, 64
    %v596 = vpop.permute.xlu0 %595
    %v598 = vmul.f32 %v579, %v596
    %v599 = vmax.f32 %v525, %v598
    %v600 = vpack.c.bf16 %v598, %v598
    %602 = vrot.lane.b32.xlu0 %v600, 32
    %v603 = vpop.permute.xlu0 %602
    %v605 = vsel %vm66, %v603, 0
    %607 = vmatprep.subr.bf16.mxu0 0
    %608 = vmatpush1.bf16.msra.mxu0 %v156
    %609 = vmatprep.subr.bf16.mxu0 0
    %610 = vmatpush1.bf16.msra.mxu0 %v157
    %611 = vmatprep.subr.bf16.mxu0 0
    %612 = vmatpush1.bf16.msra.mxu0 0
    %613 = vmatprep.subr.bf16.mxu0 0
    %614 = vmatpush1.bf16.msra.mxu0 0
    %615 = vmatprep.subr.bf16.mxu0 0
    %616 = vmatpush1.bf16.msra.mxu0 0
    %617 = vmatprep.subr.bf16.mxu0 0
    %618 = vmatpush1.bf16.msra.mxu0 0
    %619 = vmatprep.subr.bf16.mxu0 0
    %620 = vmatpush1.bf16.msra.mxu0 0
    %621 = vmatprep.subr.bf16.mxu0 0
    %622 = vmatpush1.bf16.msra.mxu0 0
    %623 = vmatprep.subr.bf16.mxu0 0
    %624 = vmatpush1.bf16.msra.mxu0 0
    %625 = vmatprep.subr.bf16.mxu0 0
    %626 = vmatpush1.bf16.msra.mxu0 0
    %627 = vmatprep.subr.bf16.mxu0 0
    %628 = vmatpush1.bf16.msra.mxu0 0
    %629 = vmatprep.subr.bf16.mxu0 0
    %630 = vmatpush1.bf16.msra.mxu0 0
    %631 = vmatprep.subr.bf16.mxu0 0
    %632 = vmatpush1.bf16.msra.mxu0 0
    %633 = vmatprep.subr.bf16.mxu0 0
    %634 = vmatpush1.bf16.msra.mxu0 0
    %635 = vmatprep.subr.bf16.mxu0 0
    %636 = vmatpush1.bf16.msra.mxu0 0
    %637 = vmatprep.subr.bf16.mxu0 0
    %638 = vmatpush1.bf16.msra.mxu0 0
    %639 = vmatprep.mubr.bf16.mxu0 0
    %640 = vmatmul.mubr.bf16.gmra.mrb[0].mxu0 %v605
    %v641 = vpop.f32.mrb[0].mxu0
    %v642 = vadd.f32 0.0, %v641
    %v643 = vpop.f32.mrb[0].mxu0
    %v644 = vpop.f32.mrb[0].mxu0
    %v645 = vpop.f32.mrb[0].mxu0
    %646 = vdwg.mxu0
    %v647 = vadd.f32 %v138, %v642
    %v648 = vxor.u32 %v647, 2147483648
    %v649 = vmul.f32 %v648, 1.442695
    %v650 = vpow.pop %v649
    %v651 = vadd.f32 %v650, 1.0
    %v652 = vrcp.pop %v651
    %v653 = vmul.f32 1.0, %v652
    %v654 = vmul.f32 %v653, 2.0
    %v655 = vsub.f32 %v654, 1.0
    %v656 = vmul.f32 %v653, %v592
    %658 = vrot.lane.b32.xlu0 %v655, 64
    %v659 = vpop.permute.xlu0 %658
    %v661 = vmul.f32 %v653, %v659
    %663 = vrot.lane.b32.xlu0 %v661, 32
    %v664 = vpop.permute.xlu0 %663
    %v666 = vadd.f32 %v656, %v664
    %v667 = vtanh.pop %v666
    %669 = vrot.lane.b32.xlu0 %v667, 64
    %v670 = vpop.permute.xlu0 %669
    %v672 = vmul.f32 %v653, %v670
    %v673 = vmax.f32 %v599, %v672
    %v674 = vpack.c.bf16 %v672, %v672
    %676 = vrot.lane.b32.xlu0 %v674, 32
    %v677 = vpop.permute.xlu0 %676
    %v679 = vsel %vm66, %v677, 0
    %681 = vmatprep.subr.bf16.mxu0 0
    %682 = vmatpush1.bf16.msra.mxu0 %v156
    %683 = vmatprep.subr.bf16.mxu0 0
    %684 = vmatpush1.bf16.msra.mxu0 %v157
    %685 = vmatprep.subr.bf16.mxu0 0
    %686 = vmatpush1.bf16.msra.mxu0 0
    %687 = vmatprep.subr.bf16.mxu0 0
    %688 = vmatpush1.bf16.msra.mxu0 0
    %689 = vmatprep.subr.bf16.mxu0 0
    %690 = vmatpush1.bf16.msra.mxu0 0
    %691 = vmatprep.subr.bf16.mxu0 0
    %692 = vmatpush1.bf16.msra.mxu0 0
    %693 = vmatprep.subr.bf16.mxu0 0
    %694 = vmatpush1.bf16.msra.mxu0 0
    %695 = vmatprep.subr.bf16.mxu0 0
    %696 = vmatpush1.bf16.msra.mxu0 0
    %697 = vmatprep.subr.bf16.mxu0 0
    %698 = vmatpush1.bf16.msra.mxu0 0
    %699 = vmatprep.subr.bf16.mxu0 0
    %700 = vmatpush1.bf16.msra.mxu0 0
    %701 = vmatprep.subr.bf16.mxu0 0
    %702 = vmatpush1.bf16.msra.mxu0 0
    %703 = vmatprep.subr.bf16.mxu0 0
    %704 = vmatpush1.bf16.msra.mxu0 0
    %705 = vmatprep.subr.bf16.mxu0 0
    %706 = vmatpush1.bf16.msra.mxu0 0
    %707 = vmatprep.subr.bf16.mxu0 0
    %708 = vmatpush1.bf16.msra.mxu0 0
    %709 = vmatprep.subr.bf16.mxu0 0
    %710 = vmatpush1.bf16.msra.mxu0 0
    %711 = vmatprep.subr.bf16.mxu0 0
    %712 = vmatpush1.bf16.msra.mxu0 0
    %713 = vmatprep.mubr.bf16.mxu0 0
    %714 = vmatmul.mubr.bf16.gmra.mrb[0].mxu0 %v679
    %v715 = vpop.f32.mrb[0].mxu0
    %v716 = vadd.f32 0.0, %v715
    %v717 = vpop.f32.mrb[0].mxu0
    %v718 = vpop.f32.mrb[0].mxu0
    %v719 = vpop.f32.mrb[0].mxu0
    %720 = vdwg.mxu0
    %v721 = vadd.f32 %v141, %v716
    %v722 = vxor.u32 %v721, 2147483648
    %v723 = vmul.f32 %v722, 1.442695
    %v724 = vpow.pop %v723
    %v725 = vadd.f32 %v724, 1.0
    %v726 = vrcp.pop %v725
    %v727 = vmul.f32 1.0, %v726
    %v728 = vmul.f32 %v727, 2.0
    %v729 = vsub.f32 %v728, 1.0
    %v730 = vmul.f32 %v727, %v666
    %732 = vrot.lane.b32.xlu0 %v729, 64
    %v733 = vpop.permute.xlu0 %732
    %v735 = vmul.f32 %v727, %v733
    %737 = vrot.lane.b32.xlu0 %v735, 32
    %v738 = vpop.permute.xlu0 %737
    %v740 = vadd.f32 %v730, %v738
    %v741 = vtanh.pop %v740
    %743 = vrot.lane.b32.xlu0 %v741, 64
    %v744 = vpop.permute.xlu0 %743
    %v746 = vmul.f32 %v727, %v744
    %v747 = vmax.f32 %v673, %v746
    %v748 = vtanh.pop %v747
    %v749 = vpack.c.bf16 %v748, %v748
    %v750 = vld [vmem:[%s3] sm:$0xf]
    %v751 = vld [vmem:[%s3 + $0x4] sm:$0xf]
    %v752 = vld [vmem:[%s3 + $0x8] sm:$0xf]
    %v753 = vld [vmem:[%s3 + $0xc] sm:$0xf]
    %v754 = vld [vmem:[%s4] sm:$0x1]
    %v756 = vlaneseq
    %v757 = vshrl.u32 %v756, 7
    %v758 = vsub.s32 0, %v757
    %v759 = vrot.slane %v754, %v758
    %762 = vrot.lane.b32.xlu0 %v749, 32
    %v763 = vpop.permute.xlu0 %762
    %v768 = vunpack.c.l.b16 %v750
    %v769 = vunpack.c.l.b16 %v751
    %v770 = vunpack.c.l.b16 %v752
    %v771 = vunpack.c.l.b16 %v753
    %v772 = vpack.c.b16 %v769, %v768
    %v773 = vpack.c.b16 %v771, %v770
    %v777 = vsel %vm66, %v763, 0
    %779 = vmatprep.subr.bf16.mxu0 0
    %780 = vmatpush1.bf16.msra.mxu0 %v772
    %781 = vmatprep.subr.bf16.mxu0 0
    %782 = vmatpush1.bf16.msra.mxu0 %v773
    %783 = vmatprep.subr.bf16.mxu0 0
    %784 = vmatpush1.bf16.msra.mxu0 0
    %785 = vmatprep.subr.bf16.mxu0 0
    %786 = vmatpush1.bf16.msra.mxu0 0
    %787 = vmatprep.subr.bf16.mxu0 0
    %788 = vmatpush1.bf16.msra.mxu0 0
    %789 = vmatprep.subr.bf16.mxu0 0
    %790 = vmatpush1.bf16.msra.mxu0 0
    %791 = vmatprep.subr.bf16.mxu0 0
    %792 = vmatpush1.bf16.msra.mxu0 0
    %793 = vmatprep.subr.bf16.mxu0 0
    %794 = vmatpush1.bf16.msra.mxu0 0
    %795 = vmatprep.subr.bf16.mxu0 0
    %796 = vmatpush1.bf16.msra.mxu0 0
    %797 = vmatprep.subr.bf16.mxu0 0
    %798 = vmatpush1.bf16.msra.mxu0 0
    %799 = vmatprep.subr.bf16.mxu0 0
    %800 = vmatpush1.bf16.msra.mxu0 0
    %801 = vmatprep.subr.bf16.mxu0 0
    %802 = vmatpush1.bf16.msra.mxu0 0
    %803 = vmatprep.subr.bf16.mxu0 0
    %804 = vmatpush1.bf16.msra.mxu0 0
    %805 = vmatprep.subr.bf16.mxu0 0
    %806 = vmatpush1.bf16.msra.mxu0 0
    %807 = vmatprep.subr.bf16.mxu0 0
    %808 = vmatpush1.bf16.msra.mxu0 0
    %809 = vmatprep.subr.bf16.mxu0 0
    %810 = vmatpush1.bf16.msra.mxu0 0
    %811 = vmatprep.mubr.bf16.mxu0 0
    %812 = vmatmul.mubr.bf16.gmra.mrb[0].mxu0 %v777
    %v813 = vpop.f32.mrb[0].mxu0
    %v814 = vadd.f32 %v759, %v813
    %v815 = vpop.f32.mrb[0].mxu0
    %v816 = vpop.f32.mrb[0].mxu0
    %v817 = vpop.f32.mrb[0].mxu0
    %818 = vdwg.mxu0
    %vm819 = vcmask 39936
    %820 = vst.msk [vmem:[#allocation2] sm:$0xff] %vm819, %v814
    // Predicated region
    $region22: #{tpu_custom_call.1} parent=1 // pred_check
      _
    $region23: #{tpu_custom_call.1} parent=1 // pred_check_branch
      %822 = sbr.rel (0) target = $region25
    $region24: #{tpu_custom_call.1} parent=1 // pred_region
      %s824 = ssub.s32 128, 128
      %825 = vsyncadd [#allocation3], %s824
      %s827 = sshll.u32 [#allocation2], 4
      %s828 = int_to_ptr.vmem [resolvable:$true] %s827
      %830 = dma.vmem_to_hbm [thread:$0]  %s828, 128, %s5, [#allocation3]
    $region25: #{tpu_custom_call.1} parent=1 // pred_fallthru
      _
    // Predicated region
    $region26: #{tpu_custom_call.1} parent=1 // pred_check
      _
    $region27: #{tpu_custom_call.1} parent=1 // pred_check_branch
      %832 = sbr.rel (0) target = $region29
    $region28: #{tpu_custom_call.1} parent=1 // pred_region
      %833 = dma.done [#allocation3], 128
    $region29: #{tpu_custom_call.1} parent=1 // pred_fallthru
      _
    %834 = vsyncpa [#allocation3], 1

</llo_original>
